<compile_context>
chip_gen: v6e
topology: v6e:2x2x1
jax: 0.10.0
libtpu: 0.0.40
codegen_flags: <defaults>
</compile_context>

<pallas_src>
import functools

import jax
import jax.numpy as jnp
from jax.experimental import pallas as pl
from jax.experimental.pallas import tpu as pltpu


def _round_up(x, m):
    return ((x + m - 1) // m) * m


def _cdiv(a, b):
    return (a + b - 1) // b


def _vmem_capacity_bytes():
    """Best-effort physical-VMEM query; conservative 64 MiB fallback."""
    try:
        info = pltpu.get_tpu_info()
        cap = getattr(info, "vmem_capacity_bytes", None)
        if cap:
            return int(cap)
    except Exception:
        pass
    return 64 * 1024 * 1024


def _replicator_kernel(wt_ref, x_ref, o_ref, *, mxu_bf16):
    """One tile of rows: fitnesses -> avg fitness -> replicator update -> relu.

    wt_ref : (n_eff, n_eff) pre-transposed weight (weight.T), resident in VMEM.
    x_ref  : (tm, n_eff)    tile of flattened rows (last dim on lanes).
    """
    x = x_ref[...]                                   # no unconditional astype copy
    x_mxu = x.astype(jnp.bfloat16) if mxu_bf16 else x
    # fitnesses[r, m] = sum_n weight[m, n] * x[r, n] == (x @ weight.T)[r, m]
    fit = jnp.dot(x_mxu, wt_ref[...], preferred_element_type=jnp.float32)   # MXU
    xf = x.astype(jnp.float32)                       # no-op for f32 inputs
    # avg_fitness[r] = sum_m x[r, m] * fit[r, m]
    avg = jnp.sum(xf * fit, axis=-1, keepdims=True)  # XLU reduce, hides under MXU
    out = xf + xf * (fit - avg)
    o_ref[...] = jnp.maximum(out, 0.0).astype(o_ref.dtype)


@functools.partial(jax.jit, static_argnames=("block_rows", "mxu_bf16"))
def replicator_layer(x, weight, mask_matrix=None, *, block_rows=1024, mxu_bf16=False):
    """x: (I, J, N) float32, weight: (N, N) float32, optional boolean upper-tri mask."""
    if mask_matrix is not None:
        # Weight preprocessing is glue; keep it in plain JAX.
        weight = jnp.where(mask_matrix, 0.0, weight)

    I, J, N = x.shape
    rows = I * J

    # --- probability axis: keep it UNPADDED at small N (biggest HBM saving). --
    # Only pad when N is large and the pad fraction is small; padding is
    # semantics-preserving (padded lanes stay zero through update + relu).
    if N >= 512 and N % 128 != 0:
        n_eff = _round_up(N, 128)
    else:
        n_eff = N

    wt_dtype = jnp.bfloat16 if mxu_bf16 else jnp.float32
    if n_eff != N:
        weight = jnp.pad(weight, ((0, n_eff - N), (0, n_eff - N)))
    # Pre-transpose ONCE here so the kernel runs a plain (tm,n)@(n,n) matmul.
    wt = weight.T.astype(wt_dtype)

    x2 = x.reshape(rows, N)
    if n_eff != N:
        x2 = jnp.pad(x2, ((0, 0), (0, n_eff - N)))

    # --- generation-aware VMEM budget -----------------------------------------
    vmem_cap = _vmem_capacity_bytes()
    if vmem_cap <= 64 * 1024 * 1024:                 # v7x: 64 MiB physical per TC
        vmem_budget = vmem_cap - 12 * 1024 * 1024
    else:                                            # v5e/v6e: 128 MiB physical
        vmem_budget = int(vmem_cap * 0.80)

    x_bytes = jnp.dtype(x.dtype).itemsize
    weight_bytes = n_eff * n_eff * jnp.dtype(wt_dtype).itemsize  # single-buffered resident

    def _tile_bytes(tm):
        # double-buffered input + double-buffered output + f32 intermediates
        # (fit, update temp, bf16 operand copy slack)
        return (2 * tm * n_eff * x_bytes
                + 2 * tm * n_eff * x_bytes
                + 3 * tm * n_eff * 4)

    # --- row tile: as large as allowed, multiple of 8, VMEM-budgeted ----------
    max_tm = max(8, _round_up(block_rows, 8))
    while max_tm > 8 and weight_bytes + _tile_bytes(max_tm) > vmem_budget:
        max_tm = _round_up(max_tm // 2, 8)
    # TODO(synk): for N where the resident (n_eff, n_eff) weight itself no
    # longer fits in VMEM (notably v7x's 64 MiB at f32 n_eff >~ 3.4k), add a
    # grid axis tiling the weight's output-M dim with a partial-avg accumulator
    # instead of keeping the whole weight resident.

    # Choose a tile count that (nearly) divides `rows` (minimal row padding),
    # and make the grid even when >1 so v7x's two TensorCores split it evenly.
    num_tiles = _cdiv(rows, max_tm)
    if num_tiles > 1 and num_tiles % 2 == 1:
        num_tiles += 1
    tm = _round_up(_cdiv(rows, num_tiles), 8)
    padded_rows = num_tiles * tm

    if padded_rows != rows:
        # Zero rows stay zero through the update + relu and are sliced off below.
        x2 = jnp.pad(x2, ((0, padded_rows - rows), (0, 0)))

    grid = (num_tiles,)

    est_bytes = weight_bytes + _tile_bytes(tm)
    vmem_limit = min(vmem_budget, max(est_bytes + 4 * 1024 * 1024, 16 * 1024 * 1024))

    kernel = functools.partial(_replicator_kernel, mxu_bf16=mxu_bf16)

    out2 = pl.pallas_call(
        kernel,
        out_shape=jax.ShapeDtypeStruct((padded_rows, n_eff), x.dtype),
        grid_spec=pltpu.PrefetchScalarGridSpec(
            num_scalar_prefetch=0,
            grid=grid,
            in_specs=[
                # Full pre-transposed weight, constant across the grid:
                # single-buffer it (no second VMEM copy, no re-DMA per step).
                pl.BlockSpec((n_eff, n_eff), lambda i: (0, 0),
                             pipeline_mode=pl.Buffered(1)),
                # Row tile of x (last dim = full array extent -> no lane pad),
                # double-buffered by the default pipeliner.
                pl.BlockSpec((tm, n_eff), lambda i: (i, 0)),
            ],
            out_specs=pl.BlockSpec((tm, n_eff), lambda i: (i, 0)),
        ),
        compiler_params=pltpu.CompilerParams(
            dimension_semantics=("parallel",),
            vmem_limit_bytes=vmem_limit,
        ),
    )(wt, x2)

    out2 = out2[:rows, :N] if (padded_rows != rows or n_eff != N) else out2
    return out2.reshape(I, J, N)


def _reference(x, weight, mask_matrix=None):
    """Pure-JAX reference matching the PyTorch forward exactly."""
    if mask_matrix is not None:
        weight = jnp.where(mask_matrix, 0.0, weight)
    fit = jnp.einsum('mn,ijn->ijm', weight, x)
    avg = jnp.einsum('ijm,ijm->ij', x, fit)[..., None]
    return jax.nn.relu(x + x * (fit - avg))


def _xavier_uniform(key, n):
    # nn.init.xavier_uniform_ on an (n, n) tensor: bound = sqrt(6 / (n + n))
    bound = (6.0 / (n + n)) ** 0.5
    return jax.random.uniform(key, (n, n), jnp.float32, -bound, bound)


if __name__ == "__main__":
    prob_space_size = 32   # N
    I, J = 2, 8            # leading "i j" axes of the input

    key = jax.random.PRNGKey(0)
    k_w, k_x, k_x2 = jax.random.split(key, 3)

    weight = _xavier_uniform(k_w, prob_space_size)
    # Probability-simplex-like input (softmax over last axis), as the model implies.
    logits = jax.random.normal(k_x, (I, J, prob_space_size), jnp.float32)
    x = jax.nn.softmax(logits, axis=-1)

    # --- mask=False path (single tile, unpadded N=32) ---
    out = jax.block_until_ready(replicator_layer(x, weight))
    ref = _reference(x, weight)
    assert out.shape == (I, J, prob_space_size)
    assert jnp.allclose(out, ref, atol=1e-5, rtol=1e-5)

    # --- mask=True path (upper-triangular weight zeroed) ---
    mask_matrix = jnp.triu(
        jnp.ones((prob_space_size, prob_space_size), dtype=bool), k=1)
    out_m = jax.block_until_ready(replicator_layer(x, weight, mask_matrix))
    ref_m = _reference(x, weight, mask_matrix)
    assert jnp.allclose(out_m, ref_m, atol=1e-5, rtol=1e-5)

    # --- multi-tile path (1200 rows -> even grid=2, tm=600, no row padding) ---
    I2, J2 = 3, 400
    logits2 = jax.random.normal(k_x2, (I2, J2, prob_space_size), jnp.float32)
    xb = jax.nn.softmax(logits2, axis=-1)
    out_b = jax.block_until_ready(replicator_layer(xb, weight))
    ref_b = _reference(xb, weight)
    assert jnp.allclose(out_b, ref_b, atol=1e-5, rtol=1e-5)

    # --- optional bf16-MXU path (for the large-N / MXU-bound regime) ---
    out_bf = jax.block_until_ready(replicator_layer(x, weight, mxu_bf16=True))
    assert jnp.allclose(out_bf, ref, atol=1e-2, rtol=1e-2)

    print("KERNEL_OK")
</pallas_src>

<mosaic_0001>
module attributes {stable_mosaic.version = 11 : i64} {
  func.func @_replicator_kernel(%arg0: i32, %arg1: memref<32x32xf32, #tpu.memory_space<vmem>>, %arg2: memref<16x32xf32, #tpu.memory_space<vmem>>, %arg3: memref<16x32xf32, #tpu.memory_space<vmem>>) attributes {dimension_semantics = [#tpu.dimension_semantics<parallel>], iteration_bounds = array<i64: 1>, scalar_prefetch = 0 : i64, scratch_operands = 0 : i64, tpu.core_type = #tpu.core_type<tc>, window_params = [{pipeline_mode = #tpu.pipeline_mode<synchronous>, transform_indices = @transform_0, window_bounds = array<i64: 32, 32>}, {transform_indices = @transform_1, window_bounds = array<i64: 16, 32>}, {transform_indices = @transform_2, window_bounds = array<i64: 16, 32>}]} {
    %c0 = arith.constant 0 : index
    %c0_0 = arith.constant 0 : index
    %0 = vector.load %arg2[%c0, %c0_0] : memref<16x32xf32, #tpu.memory_space<vmem>>, vector<16x32xf32>
    %c0_1 = arith.constant 0 : index
    %c0_2 = arith.constant 0 : index
    %1 = vector.load %arg1[%c0_1, %c0_2] : memref<32x32xf32, #tpu.memory_space<vmem>>, vector<32x32xf32>
    %cst = arith.constant dense<0.000000e+00> : vector<16x32xf32>
    %2 = tpu.matmul %0, %1, %cst {dimension_numbers = #tpu.dot_dimension_numbers<[1], [0], [0], [1], [0, 0, 1, 1], [], []>} : vector<16x32xf32>, vector<32x32xf32>, vector<16x32xf32> -> vector<16x32xf32>
    %3 = arith.mulf %0, %2 : vector<16x32xf32>
    %cst_3 = arith.constant dense<0.000000e+00> : vector<16xf32>
    %4 = vector.multi_reduction <add>, %3, %cst_3 [1] : vector<16x32xf32> to vector<16xf32>
    %5 = vector.shape_cast %4 : vector<16xf32> to vector<16x1xf32>
    %6 = vector.broadcast %5 : vector<16x1xf32> to vector<16x32xf32>
    %7 = arith.subf %2, %6 : vector<16x32xf32>
    %8 = arith.mulf %0, %7 : vector<16x32xf32>
    %9 = arith.addf %0, %8 : vector<16x32xf32>
    %cst_4 = arith.constant 0.000000e+00 : f32
    %10 = vector.broadcast %cst_4 : f32 to vector<16x32xf32>
    %11 = arith.maximumf %9, %10 : vector<16x32xf32>
    %c0_5 = arith.constant 0 : index
    %c0_6 = arith.constant 0 : index
    %12 = vector.load %arg3[%c0_5, %c0_6] : memref<16x32xf32, #tpu.memory_space<vmem>>, vector<16x32xf32>
    tpu.vector_store %arg3[%c0_5, %c0_6], %11 {strides = array<i32>} : memref<16x32xf32, #tpu.memory_space<vmem>>, vector<16x32xf32>,
    return
  }
  func.func @transform_0(%arg0: i32) -> (i32, i32) {
    %c0_i32 = arith.constant 0 : i32
    %c0_i32_0 = arith.constant 0 : i32
    %c0_i32_1 = arith.constant 0 : i32
    return %c0_i32, %c0_i32_0 : i32, i32
  }
  func.func @transform_1(%arg0: i32) -> (i32, i32) {
    %c0_i32 = arith.constant 0 : i32
    %c0_i32_0 = arith.constant 0 : i32
    return %arg0, %c0_i32 : i32, i32
  }
  func.func @transform_2(%arg0: i32) -> (i32, i32) {
    %c0_i32 = arith.constant 0 : i32
    %c0_i32_0 = arith.constant 0 : i32
    return %arg0, %c0_i32 : i32, i32
  }
}

</mosaic_0001>

<llo_original>
// kernel: replicator_layer.1
$region0: #{replicator_layer.1}
  #allocation0 [shape = 'u32[]', space=smem, size = 0x4, offset = 0x4, fixed_abs, tag = 'smem constant byte address 0x4 - core index']
  #allocation1 [shape = 'u32[144,128]{1,0:T(1,128)}', space=vmem, size = 0x12000, scoped, tag = 'internal scratch']
  %s0 = inlined_call_operand.vmem [shape: f32[32,32], index: 0, kind: input, shape index: {}]
  %s1 = inlined_call_operand.vmem [shape: f32[16,32], index: 1, kind: input, shape index: {}]
  %s2 = inlined_call_operand.hbm [shape: f32[16,32], index: 2, kind: output, shape index: {}]
  %s3 = sld [smem:[#allocation0]]
  $region18: #{replicator_layer.1} parent=0
    _
  %s5 = ssub.s32 1, %s3
  %s6 = scalar_select 0, %s5, %s3
  $region1: #{replicator_layer.1} parent=0
    #allocation2 [shape = 'u8[8192]{0}', space=vmem, size = 0x2000, scoped, tag = 'output window, operand 0, single buffered']
    #allocation3 [shape = 's32[1]{0}', space=sflag, size = 0x4, scoped, tag = 'scoped memory for replicator_layer.1']
    %7 = vsyncpa [#allocation3], 0
    // Predicated region
    $region2: #{replicator_layer.1} parent=1 // pred_check
      _
    $region3: #{replicator_layer.1} parent=1 // pred_check_branch
      %9 = sbr.rel (0) target = $region5
    $region4: #{replicator_layer.1} parent=1 // pred_region
      _
    $region5: #{replicator_layer.1} parent=1 // pred_fallthru
      _
    // Predicated region
    $region6: #{replicator_layer.1} parent=1 // pred_check
      _
    $region7: #{replicator_layer.1} parent=1 // pred_check_branch
      %11 = sbr.rel (0) target = $region9
    $region8: #{replicator_layer.1} parent=1 // pred_region
      _
    $region9: #{replicator_layer.1} parent=1 // pred_fallthru
      _
    %v12 = vld [vmem:[%s1] sm:$0xff]
    %v13 = vld [vmem:[%s1 + $0x8] sm:$0xff]
    %v14 = vld [vmem:[%s0] sm:$0xff]
    %v15 = vld [vmem:[%s0 + $0x8] sm:$0xff]
    %v16 = vld [vmem:[%s0 + $0x10] sm:$0xff]
    %v17 = vld [vmem:[%s0 + $0x18] sm:$0xff]
    %vm18 = vcmask 261120
    %v20 = vsel %vm18, %v12, 0
    %v23 = vsel %vm18, %v13, 0
    %25 = vmatprep.subr.mxu0 0.0
    %26 = vmatpush1.msra.mxu0 0.0
    %27 = vmatprep.subr.mxu0 0.0
    %28 = vmatpush1.msra.mxu0 0.0
    %29 = vmatprep.subr.mxu0 0.0
    %30 = vmatpush1.msra.mxu0 0.0
    %31 = vmatprep.subr.mxu0 0.0
    %32 = vmatpush1.msra.mxu0 0.0
    %33 = vmatprep.subr.mxu0 0.0
    %34 = vmatpush1.msra.mxu0 0.0
    %35 = vmatprep.subr.mxu0 0.0
    %36 = vmatpush1.msra.mxu0 0.0
    %37 = vmatprep.subr.mxu0 0.0
    %38 = vmatpush1.msra.mxu0 0.0
    %39 = vmatprep.subr.mxu0 0.0
    %40 = vmatpush1.msra.mxu0 0.0
    %41 = vmatprep.subr.mxu0 0.0
    %42 = vmatpush1.msra.mxu0 0.0
    %43 = vmatprep.subr.mxu0 0.0
    %44 = vmatpush1.msra.mxu0 0.0
    %45 = vmatprep.subr.mxu0 0.0
    %46 = vmatpush1.msra.mxu0 0.0
    %47 = vmatprep.subr.mxu0 0.0
    %48 = vmatpush1.msra.mxu0 0.0
    %49 = vmatprep.subr.mxu0 0.0
    %50 = vmatpush1.msra.mxu0 %v17
    %51 = vmatprep.subr.mxu0 0.0
    %52 = vmatpush1.msra.mxu0 %v16
    %53 = vmatprep.subr.mxu0 0.0
    %54 = vmatpush1.msra.mxu0 %v15
    %55 = vmatprep.subr.mxu0 0.0
    %56 = vmatpush1.msra.mxu0 %v14
    %57 = vmatprep.subr.mxu0 0.0
    %58 = vmatpush2.msra.mxu0 0.0
    %59 = vmatprep.subr.mxu0 0.0
    %60 = vmatpush2.msra.mxu0 0.0
    %61 = vmatprep.subr.mxu0 0.0
    %62 = vmatpush2.msra.mxu0 0.0
    %63 = vmatprep.subr.mxu0 0.0
    %64 = vmatpush2.msra.mxu0 0.0
    %65 = vmatprep.subr.mxu0 0.0
    %66 = vmatpush2.msra.mxu0 0.0
    %67 = vmatprep.subr.mxu0 0.0
    %68 = vmatpush2.msra.mxu0 0.0
    %69 = vmatprep.subr.mxu0 0.0
    %70 = vmatpush2.msra.mxu0 0.0
    %71 = vmatprep.subr.mxu0 0.0
    %72 = vmatpush2.msra.mxu0 0.0
    %73 = vmatprep.subr.mxu0 0.0
    %74 = vmatpush2.msra.mxu0 0.0
    %75 = vmatprep.subr.mxu0 0.0
    %76 = vmatpush2.msra.mxu0 0.0
    %77 = vmatprep.subr.mxu0 0.0
    %78 = vmatpush2.msra.mxu0 0.0
    %79 = vmatprep.subr.mxu0 0.0
    %80 = vmatpush2.msra.mxu0 0.0
    %81 = vmatprep.subr.mxu0 0.0
    %82 = vmatpush2.msra.mxu0 0.0
    %83 = vmatprep.subr.mxu0 0.0
    %84 = vmatpush2.msra.mxu0 0.0
    %85 = vmatprep.subr.mxu0 0.0
    %86 = vmatpush2.msra.mxu0 0.0
    %87 = vmatprep.subr.mxu0 0.0
    %88 = vmatpush2.msra.mxu0 0.0
    %89 = vmatprep.mubr.f32.mxu0 0.0
    %90 = vmatmul.mubr.f32.gmra.mxu0 %v20
    %v91 = vpop.f32.mrf.mxu0
    %v92 = vadd.f32 0.0, %v91
    %v93 = vpop.f32.mrf.mxu0
    %94 = vmatprep.mubr.f32.mxu0 0.0
    %95 = vmatmul.mubr.f32.gmra.mxu0 %v23
    %v96 = vpop.f32.mrf.mxu0
    %v97 = vadd.f32 0.0, %v96
    %v98 = vpop.f32.mrf.mxu0
    %99 = vdwg.mxu0
    %v100 = vmul.f32 %v12, %v92
    %v101 = vmul.f32 %v13, %v97
    %v102 = vsel %vm18, %v100, 0.0
    %103 = vadd.xlane.f32.xlu0 %v102
    %v104 = vpop.xlane.xlu0 %103
    %v105 = vsel %vm18, %v101, 0.0
    %106 = vadd.xlane.f32.xlu0 %v105
    %v107 = vpop.xlane.xlu0 %106
    %v108 = vsub.f32 %v92, %v104
    %v109 = vsub.f32 %v97, %v107
    %v110 = vmul.f32 %v12, %v108
    %v111 = vmul.f32 %v13, %v109
    %v112 = vadd.f32 %v12, %v110
    %v113 = vadd.f32 %v13, %v111
    %v114 = vmax.f32 %v112, 0.0
    %v115 = vmax.f32 %v113, 0.0
    %116 = vst.msk [vmem:[#allocation2] sm:$0xff] %vm18, %v114
    %117 = vst.msk [vmem:[#allocation2 + $0x8] sm:$0xff] %vm18, %v115
    // Predicated region
    $region10: #{replicator_layer.1} parent=1 // pred_check
      _
    $region11: #{replicator_layer.1} parent=1 // pred_check_branch
      %119 = sbr.rel (0) target = $region13
    $region12: #{replicator_layer.1} parent=1 // pred_region
      %s121 = ssub.s32 256, 256
      %122 = vsyncadd [#allocation3], %s121
      %s123 = sshll.u32 [#allocation2], 4
      %s124 = int_to_ptr.vmem [resolvable:$true] %s123
      %129 = dma.vmem_to_hbm [thread:$0]  %s124, 256, %s2, [#allocation3], 128, 128, 8
    $region13: #{replicator_layer.1} parent=1 // pred_fallthru
      _
    // Predicated region
    $region14: #{replicator_layer.1} parent=1 // pred_check
      _
    $region15: #{replicator_layer.1} parent=1 // pred_check_branch
      %131 = sbr.rel (0) target = $region17
    $region16: #{replicator_layer.1} parent=1 // pred_region
      %132 = dma.done [#allocation3], 256
    $region17: #{replicator_layer.1} parent=1 // pred_fallthru
      _
    %133 = vsyncpa [#allocation3], 1

</llo_original>
